<compile_context>
chip_gen: v5e
topology: v5e:2x2
jax: 0.10.0
libtpu: 0.0.40
codegen_flags: <defaults>
</compile_context>

<pallas_src>
import functools

import jax
import jax.numpy as jnp
import numpy as np
from jax.experimental import pallas as pl
from jax.experimental.pallas import tpu as pltpu


def _round_up(x, m):
    return (x + m - 1) // m * m


def _num_tensorcores():
    """2 on v7x (megacore split via a leading 'parallel' grid axis), else 1."""
    try:
        kind = jax.devices()[0].device_kind.lower()
    except Exception:
        return 1
    return 2 if "7" in kind else 1


def _vmem_capacity_bytes():
    try:
        cap = int(getattr(pltpu.get_tpu_info(), "vmem_capacity_bytes", 0))
        if cap > 0:
            return cap
    except Exception:
        pass
    return 64 * 1024 * 1024          # conservative (v7x-sized) fallback


def _mixed_loss_kernel(pred_ref, tgt_ref, acc_ref, *,
                       focal_alpha, gamma, B, R, J, n_valid):
    """Elementwise focal/dice partial sums into a tiny resident accumulator.

    pred_ref / tgt_ref : (B, R, 128) tiles of the flattened inputs.
    acc_ref            : (3*B, 8, 128) f32 resident accumulator
                         rows [0:B)   -> focal-loss elements
                         rows [B:2B)  -> sigmoid(pred) * target
                         rows [2B:3B) -> sigmoid(pred) + target
    Contributions are reduced over R in sublane groups (VPU-only) before the
    accumulator read-modify-write.  The ragged tail (and any block mapped past
    the end on the 2-core split) is masked in-kernel on the boundary block.
    """
    c = pl.program_id(0)
    j = pl.program_id(1)

    @pl.when(j == 0)
    def _():
        acc_ref[...] = jnp.zeros_like(acc_ref)

    start_elem = (c * J + j) * (R * 128)

    x_raw = pred_ref[...].astype(jnp.float32)
    t_raw = tgt_ref[...].astype(jnp.float32)

    def accumulate(x, t):
        # One exp feeds the stable softplus; a second exp recovers sigmoid
        # (EUP slots are under-subscribed; the VALU slot is the binding one).
        e = jnp.exp(-jnp.abs(x))
        sp = jnp.log1p(e)
        log_probs = jnp.minimum(x, 0.0) - sp          # log sigmoid(x)
        log_1_probs = log_probs - x                   # log(1 - sigmoid(x))
        probs = jnp.exp(log_probs)                    # sigmoid(x)

        d = t - probs
        if float(gamma) == 2.0:
            pw = d * d                                # avoid pow -> log+exp
        else:
            pw = jnp.abs(d) ** gamma
        nA = (-focal_alpha) * log_probs
        nB = (-(1.0 - focal_alpha)) * log_1_probs
        # == -|t-p|^gamma * (t*alpha*log_probs + (1-t)*(1-alpha)*log_1_probs)
        focal_elem = pw * (nB + t * (nA - nB))

        def part(v):  # (B, R, 128) -> (B, 8, 128), sublane-group partial sum
            return jnp.sum(v.reshape(B, R // 8, 8, 128), axis=1)

        acc_ref[0:B] = acc_ref[0:B] + part(focal_elem)
        acc_ref[B:2 * B] = acc_ref[B:2 * B] + part(probs * t)
        acc_ref[2 * B:3 * B] = acc_ref[2 * B:3 * B] + part(probs + t)

    fully_valid = start_elem + R * 128 <= n_valid

    @pl.when(fully_valid)
    def _():
        accumulate(x_raw, t_raw)

    @pl.when(jnp.logical_not(fully_valid))
    def _():
        # Boundary / out-of-range block: neutralize invalid lanes.
        # x = -100 gives sigmoid ~ 0 and an exactly-zero focal term (t = 0).
        limit = n_valid - start_elem
        row = jax.lax.broadcasted_iota(jnp.int32, (B, R, 128), 1)
        lane = jax.lax.broadcasted_iota(jnp.int32, (B, R, 128), 2)
        valid = (row * 128 + lane) < limit
        accumulate(jnp.where(valid, x_raw, -100.0),
                   jnp.where(valid, t_raw, 0.0))


def mixed_loss(pred, target, *, mix_alpha=10.0, focal_alpha=0.25, gamma=2.0,
               smooth=1.0):
    """MixedLoss.forward: 10.0 * FocalLoss(mean) + DiceLoss(mean).

    Inputs may be f32 / bf16 / fp16; the kernel upcasts after the DMA, so
    narrower inputs halve HBM traffic (recommended on v5e, which is HBM-bound
    in f32).
    """
    B = pred.shape[0]
    N = int(np.prod(pred.shape[1:]))

    pred2 = pred.reshape(B, N)
    tgt2 = target.reshape(B, N)

    # Only pad up to the next 128 multiple (and >= 8 rows for tiny inputs) so
    # the (B, rows, 128) reshape is a pure metadata change.  Pad content is
    # irrelevant — the kernel masks everything past element N.
    n_cols = max(_round_up(N, 128), 8 * 128)
    if n_cols != N:
        pred2 = jnp.pad(pred2, ((0, 0), (0, n_cols - N)))
        tgt2 = jnp.pad(tgt2, ((0, 0), (0, n_cols - N)))
    rows = n_cols // 128
    pred3 = pred2.reshape(B, rows, 128)
    tgt3 = tgt2.reshape(B, rows, 128)

    # ---- generation-aware tiling ------------------------------------------
    ip = jnp.dtype(pred.dtype).itemsize
    it = jnp.dtype(target.dtype).itemsize
    vmem_cap = _vmem_capacity_bytes()
    budget = min(vmem_cap // 2, 48 * 1024 * 1024)       # 32 MiB v7x, 48 MiB v5e/v6e
    vmem_limit = int(min(vmem_cap - 8 * 1024 * 1024,
                         budget + 16 * 1024 * 1024))

    per_row = 2 * B * 128 * (ip + it)                   # 2 pipeline buffers / input
    r_budget = max(8, int((budget - 2 * 1024 * 1024) // per_row) // 8 * 8)
    R = min(4096, r_budget, (rows // 8) * 8)
    R = max(8, (R // 8) * 8)

    blocks = pl.cdiv(rows, R)
    NC = 2 if (_num_tensorcores() == 2 and blocks >= 2) else 1
    J = pl.cdiv(blocks, NC)

    if NC * J > blocks:
        # Uneven 2-core split: clamp the (at most one) extra block index; its
        # contribution is fully masked in-kernel (start element >= N).
        in_idx = lambda c, j: (0, jnp.minimum(c * J + j, blocks - 1), 0)
    else:
        in_idx = lambda c, j: (0, c * J + j, 0)

    kernel = functools.partial(_mixed_loss_kernel,
                               focal_alpha=float(focal_alpha),
                               gamma=float(gamma), B=B, R=R, J=J, n_valid=N)

    acc = pl.pallas_call(
        kernel,
        out_shape=jax.ShapeDtypeStruct((NC, 3 * B, 8, 128), jnp.float32),
        grid_spec=pltpu.PrefetchScalarGridSpec(
            num_scalar_prefetch=0,
            grid=(NC, J),
            in_specs=[
                pl.BlockSpec((B, R, 128), in_idx),
                pl.BlockSpec((B, R, 128), in_idx),
            ],
            out_specs=pl.BlockSpec((None, 3 * B, 8, 128),
                                   lambda c, j: (c, 0, 0, 0)),
        ),
        compiler_params=pltpu.CompilerParams(
            dimension_semantics=("parallel", "arbitrary"),
            vmem_limit_bytes=vmem_limit),
    )(pred3, tgt3)

    # Tiny (NC, 3B, 8, 128) slab -> O(B) finish in plain JAX.
    sums = jnp.sum(acc, axis=(0, 2, 3))                 # (3*B,)
    focal_mean = jnp.sum(sums[0:B]) / (B * N)           # divide by ORIGINAL B*N
    dice = 1.0 - (2.0 * sums[B:2 * B] + smooth) / (sums[2 * B:3 * B] + smooth)
    return mix_alpha * focal_mean + jnp.mean(dice)


def _mixed_loss_ref(pred, target, *, mix_alpha=10.0, focal_alpha=0.25,
                    gamma=2.0, smooth=1.0):
    """Pure-JAX reference mirroring the PyTorch module."""
    x = pred.astype(jnp.float32)
    t = target.astype(jnp.float32)
    probs = jax.nn.sigmoid(x)
    sp = jnp.log1p(jnp.exp(-jnp.abs(x)))
    log_probs = jnp.minimum(x, 0.0) - sp
    log_1_probs = jnp.minimum(-x, 0.0) - sp
    coeff = -(jnp.abs(t - probs) ** gamma)
    focal = jnp.mean((t * focal_alpha * log_probs
                      + (1.0 - t) * (1.0 - focal_alpha) * log_1_probs) * coeff)
    B = x.shape[0]
    p2 = probs.reshape(B, -1)
    t2 = t.reshape(B, -1)
    num = 2.0 * jnp.sum(p2 * t2, axis=1) + smooth
    den = jnp.sum(p2 + t2, axis=1) + smooth
    dice = jnp.mean(1.0 - num / den)
    return mix_alpha * focal + dice


if __name__ == "__main__":
    key = jax.random.PRNGKey(0)
    k1, k2, k3, k4, k5, k6 = jax.random.split(key, 6)

    # Test 1: lane-aligned N (N = 4*16*16 = 1024), fully-valid path.
    B, C, H, W = 2, 4, 16, 16
    pred = jax.random.normal(k1, (B, C, H, W), dtype=jnp.float32)
    target = jax.random.bernoulli(k2, p=0.5, shape=(B, C, H, W)).astype(
        jnp.float32)
    loss = mixed_loss(pred, target)
    jax.block_until_ready(loss)
    ref = _mixed_loss_ref(pred, target)
    np.testing.assert_allclose(np.asarray(loss), np.asarray(ref),
                               rtol=1e-5, atol=1e-5)

    # Test 2: non-128-aligned N (2*3*7*9) exercises the in-kernel mask path.
    pred_u = jax.random.normal(k3, (2, 3, 7, 9), dtype=jnp.float32)
    target_u = jax.random.bernoulli(k4, p=0.5, shape=(2, 3, 7, 9)).astype(
        jnp.float32)
    loss_u = mixed_loss(pred_u, target_u)
    jax.block_until_ready(loss_u)
    ref_u = _mixed_loss_ref(pred_u, target_u)
    np.testing.assert_allclose(np.asarray(loss_u), np.asarray(ref_u),
                               rtol=1e-5, atol=1e-5)

    # Test 3: multi-block grid with a partial last block (N = 4*48*100 = 19200,
    # 150 rows of 128), exercises the edge-block mask and the megacore split.
    pred_m = jax.random.normal(k5, (2, 4, 48, 100), dtype=jnp.float32)
    target_m = jax.random.bernoulli(k6, p=0.5, shape=(2, 4, 48, 100)).astype(
        jnp.float32)
    loss_m = mixed_loss(pred_m, target_m)
    jax.block_until_ready(loss_m)
    ref_m = _mixed_loss_ref(pred_m, target_m)
    np.testing.assert_allclose(np.asarray(loss_m), np.asarray(ref_m),
                               rtol=1e-5, atol=1e-5)

    print("KERNEL_OK")
</pallas_src>

<mosaic_0001>
module attributes {stable_mosaic.version = 11 : i64} {
  func.func @_mixed_loss_kernel(%arg0: i32, %arg1: i32, %arg2: memref<2x8x128xf32, #tpu.memory_space<vmem>>, %arg3: memref<2x8x128xf32, #tpu.memory_space<vmem>>, %arg4: memref<1x6x8x128xf32, #tpu.memory_space<vmem>>) attributes {dimension_semantics = [#tpu.dimension_semantics<parallel>, #tpu.dimension_semantics<arbitrary>], iteration_bounds = array<i64: 1, 1>, scalar_prefetch = 0 : i64, scratch_operands = 0 : i64, tpu.core_type = #tpu.core_type<tc>, window_params = [{transform_indices = @transform_0, window_bounds = array<i64: 2, 8, 128>}, {transform_indices = @transform_1, window_bounds = array<i64: 2, 8, 128>}, {transform_indices = @transform_2, window_bounds = array<i64: 1, 6, 8, 128>}]} {
    %c0_i32 = arith.constant 0 : i32
    %0 = arith.cmpi eq, %arg1, %c0_i32 : i32
    %1 = arith.extui %0 : i1 to i32
    %c0_i32_0 = arith.constant 0 : i32
    %2 = arith.cmpi ne, %1, %c0_i32_0 : i32
    scf.if %2 {
      %cst = arith.constant 0.000000e+00 : f32
      %15 = vector.broadcast %cst : f32 to vector<6x8x128xf32>
      %c0_10 = arith.constant 0 : index
      %c0_11 = arith.constant 0 : index
      %c0_12 = arith.constant 0 : index
      %c0_13 = arith.constant 0 : index
      %16 = vector.load %arg4[%c0_10, %c0_11, %c0_12, %c0_13] : memref<1x6x8x128xf32, #tpu.memory_space<vmem>>, vector<1x6x8x128xf32>
      %17 = vector.shape_cast %16 : vector<1x6x8x128xf32> to vector<6x8x128xf32>
      %18 = vector.shape_cast %15 : vector<6x8x128xf32> to vector<1x6x8x128xf32>
      tpu.vector_store %arg4[%c0_10, %c0_11, %c0_12, %c0_13], %18 {strides = array<i32>} : memref<1x6x8x128xf32, #tpu.memory_space<vmem>>, vector<1x6x8x128xf32>,
    } else {
    }
    %c1_i32 = arith.constant 1 : i32
    %3 = arith.muli %arg0, %c1_i32 : i32
    %4 = arith.addi %3, %arg1 : i32
    %c1024_i32 = arith.constant 1024 : i32
    %5 = arith.muli %4, %c1024_i32 : i32
    %c0 = arith.constant 0 : index
    %c0_1 = arith.constant 0 : index
    %c0_2 = arith.constant 0 : index
    %6 = vector.load %arg2[%c0, %c0_1, %c0_2] : memref<2x8x128xf32, #tpu.memory_space<vmem>>, vector<2x8x128xf32>
    %c0_3 = arith.constant 0 : index
    %c0_4 = arith.constant 0 : index
    %c0_5 = arith.constant 0 : index
    %7 = vector.load %arg3[%c0_3, %c0_4, %c0_5] : memref<2x8x128xf32, #tpu.memory_space<vmem>>, vector<2x8x128xf32>
    %c1024_i32_6 = arith.constant 1024 : i32
    %8 = arith.addi %5, %c1024_i32_6 : i32
    %c1024_i32_7 = arith.constant 1024 : i32
    %9 = arith.cmpi sle, %8, %c1024_i32_7 : i32
    %10 = arith.extui %9 : i1 to i32
    %c0_i32_8 = arith.constant 0 : i32
    %11 = arith.cmpi ne, %10, %c0_i32_8 : i32
    scf.if %11 {
      %15 = math.absf %6 : vector<2x8x128xf32>
      %cst = arith.constant 0.000000e+00 : f32
      %16 = vector.broadcast %cst : f32 to vector<2x8x128xf32>
      %17 = arith.subf %16, %15 : vector<2x8x128xf32>
      %18 = math.exp %17 : vector<2x8x128xf32>
      %19 = math.log1p %18 : vector<2x8x128xf32>
      %cst_10 = arith.constant 0.000000e+00 : f32
      %20 = vector.broadcast %cst_10 : f32 to vector<2x8x128xf32>
      %21 = arith.minimumf %6, %20 : vector<2x8x128xf32>
      %22 = arith.subf %21, %19 : vector<2x8x128xf32>
      %23 = arith.subf %22, %6 : vector<2x8x128xf32>
      %24 = math.exp %22 : vector<2x8x128xf32>
      %25 = arith.subf %7, %24 : vector<2x8x128xf32>
      %26 = arith.mulf %25, %25 : vector<2x8x128xf32>
      %cst_11 = arith.constant -2.500000e-01 : f32
      %27 = vector.broadcast %cst_11 : f32 to vector<2x8x128xf32>
      %28 = arith.mulf %27, %22 : vector<2x8x128xf32>
      %cst_12 = arith.constant -7.500000e-01 : f32
      %29 = vector.broadcast %cst_12 : f32 to vector<2x8x128xf32>
      %30 = arith.mulf %29, %23 : vector<2x8x128xf32>
      %31 = arith.subf %28, %30 : vector<2x8x128xf32>
      %32 = arith.mulf %7, %31 : vector<2x8x128xf32>
      %33 = arith.addf %30, %32 : vector<2x8x128xf32>
      %34 = arith.mulf %26, %33 : vector<2x8x128xf32>
      %c0_13 = arith.constant 0 : index
      %c0_14 = arith.constant 0 : index
      %c0_15 = arith.constant 0 : index
      %c0_16 = arith.constant 0 : index
      %35 = vector.load %arg4[%c0_13, %c0_14, %c0_15, %c0_16] : memref<1x6x8x128xf32, #tpu.memory_space<vmem>>, vector<1x2x8x128xf32>
      %36 = vector.shape_cast %35 : vector<1x2x8x128xf32> to vector<2x8x128xf32>
      %37 = vector.shape_cast %34 : vector<2x8x128xf32> to vector<2x1x8x128xf32>
      %cst_17 = arith.constant dense<0.000000e+00> : vector<2x8x128xf32>
      %38 = vector.multi_reduction <add>, %37, %cst_17 [1] : vector<2x1x8x128xf32> to vector<2x8x128xf32>
      %39 = arith.addf %36, %38 : vector<2x8x128xf32>
      %c0_18 = arith.constant 0 : index
      %c0_19 = arith.constant 0 : index
      %c0_20 = arith.constant 0 : index
      %c0_21 = arith.constant 0 : index
      %40 = vector.load %arg4[%c0_18, %c0_19, %c0_20, %c0_21] : memref<1x6x8x128xf32, #tpu.memory_space<vmem>>, vector<1x2x8x128xf32>
      %41 = vector.shape_cast %40 : vector<1x2x8x128xf32> to vector<2x8x128xf32>
      %42 = vector.shape_cast %39 : vector<2x8x128xf32> to vector<1x2x8x128xf32>
      tpu.vector_store %arg4[%c0_18, %c0_19, %c0_20, %c0_21], %42 {strides = array<i32>} : memref<1x6x8x128xf32, #tpu.memory_space<vmem>>, vector<1x2x8x128xf32>,
      %c0_22 = arith.constant 0 : index
      %c2 = arith.constant 2 : index
      %c0_23 = arith.constant 0 : index
      %c0_24 = arith.constant 0 : index
      %43 = vector.load %arg4[%c0_22, %c2, %c0_23, %c0_24] : memref<1x6x8x128xf32, #tpu.memory_space<vmem>>, vector<1x2x8x128xf32>
      %44 = vector.shape_cast %43 : vector<1x2x8x128xf32> to vector<2x8x128xf32>
      %45 = arith.mulf %24, %7 : vector<2x8x128xf32>
      %46 = vector.shape_cast %45 : vector<2x8x128xf32> to vector<2x1x8x128xf32>
      %cst_25 = arith.constant dense<0.000000e+00> : vector<2x8x128xf32>
      %47 = vector.multi_reduction <add>, %46, %cst_25 [1] : vector<2x1x8x128xf32> to vector<2x8x128xf32>
      %48 = arith.addf %44, %47 : vector<2x8x128xf32>
      %c0_26 = arith.constant 0 : index
      %c2_27 = arith.constant 2 : index
      %c0_28 = arith.constant 0 : index
      %c0_29 = arith.constant 0 : index
      %49 = vector.load %arg4[%c0_26, %c2_27, %c0_28, %c0_29] : memref<1x6x8x128xf32, #tpu.memory_space<vmem>>, vector<1x2x8x128xf32>
      %50 = vector.shape_cast %49 : vector<1x2x8x128xf32> to vector<2x8x128xf32>
      %51 = vector.shape_cast %48 : vector<2x8x128xf32> to vector<1x2x8x128xf32>
      tpu.vector_store %arg4[%c0_26, %c2_27, %c0_28, %c0_29], %51 {strides = array<i32>} : memref<1x6x8x128xf32, #tpu.memory_space<vmem>>, vector<1x2x8x128xf32>,
      %c0_30 = arith.constant 0 : index
      %c4 = arith.constant 4 : index
      %c0_31 = arith.constant 0 : index
      %c0_32 = arith.constant 0 : index
      %52 = vector.load %arg4[%c0_30, %c4, %c0_31, %c0_32] : memref<1x6x8x128xf32, #tpu.memory_space<vmem>>, vector<1x2x8x128xf32>
      %53 = vector.shape_cast %52 : vector<1x2x8x128xf32> to vector<2x8x128xf32>
      %54 = arith.addf %24, %7 : vector<2x8x128xf32>
      %55 = vector.shape_cast %54 : vector<2x8x128xf32> to vector<2x1x8x128xf32>
      %cst_33 = arith.constant dense<0.000000e+00> : vector<2x8x128xf32>
      %56 = vector.multi_reduction <add>, %55, %cst_33 [1] : vector<2x1x8x128xf32> to vector<2x8x128xf32>
      %57 = arith.addf %53, %56 : vector<2x8x128xf32>
      %c0_34 = arith.constant 0 : index
      %c4_35 = arith.constant 4 : index
      %c0_36 = arith.constant 0 : index
      %c0_37 = arith.constant 0 : index
      %58 = vector.load %arg4[%c0_34, %c4_35, %c0_36, %c0_37] : memref<1x6x8x128xf32, #tpu.memory_space<vmem>>, vector<1x2x8x128xf32>
      %59 = vector.shape_cast %58 : vector<1x2x8x128xf32> to vector<2x8x128xf32>
      %60 = vector.shape_cast %57 : vector<2x8x128xf32> to vector<1x2x8x128xf32>
      tpu.vector_store %arg4[%c0_34, %c4_35, %c0_36, %c0_37], %60 {strides = array<i32>} : memref<1x6x8x128xf32, #tpu.memory_space<vmem>>, vector<1x2x8x128xf32>,
    } else {
    }
    %true = arith.constant true
    %12 = arith.xori %9, %true : i1
    %13 = arith.extui %12 : i1 to i32
    %c0_i32_9 = arith.constant 0 : i32
    %14 = arith.cmpi ne, %13, %c0_i32_9 : i32
    scf.if %14 {
      %c1024_i32_10 = arith.constant 1024 : i32
      %15 = arith.subi %c1024_i32_10, %5 : i32
      %16 = tpu.iota {dimensions = array<i32: 1>} : vector<2x8x128xi32>
      %17 = tpu.iota {dimensions = array<i32: 2>} : vector<2x8x128xi32>
      %c128_i32 = arith.constant 128 : i32
      %18 = vector.broadcast %c128_i32 : i32 to vector<2x8x128xi32>
      %19 = arith.muli %16, %18 : vector<2x8x128xi32>
      %20 = arith.addi %19, %17 : vector<2x8x128xi32>
      %21 = vector.broadcast %15 : i32 to vector<2x8x128xi32>
      %22 = arith.cmpi slt, %20, %21 : vector<2x8x128xi32>
      %cst = arith.constant -1.000000e+02 : f32
      %23 = vector.broadcast %cst : f32 to vector<2x8x128xf32>
      %24 = arith.select %22, %6, %23 : vector<2x8x128xi1>, vector<2x8x128xf32>
      %cst_11 = arith.constant 0.000000e+00 : f32
      %25 = vector.broadcast %cst_11 : f32 to vector<2x8x128xf32>
      %26 = arith.select %22, %7, %25 : vector<2x8x128xi1>, vector<2x8x128xf32>
      %27 = math.absf %24 : vector<2x8x128xf32>
      %cst_12 = arith.constant 0.000000e+00 : f32
      %28 = vector.broadcast %cst_12 : f32 to vector<2x8x128xf32>
      %29 = arith.subf %28, %27 : vector<2x8x128xf32>
      %30 = math.exp %29 : vector<2x8x128xf32>
      %31 = math.log1p %30 : vector<2x8x128xf32>
      %cst_13 = arith.constant 0.000000e+00 : f32
      %32 = vector.broadcast %cst_13 : f32 to vector<2x8x128xf32>
      %33 = arith.minimumf %24, %32 : vector<2x8x128xf32>
      %34 = arith.subf %33, %31 : vector<2x8x128xf32>
      %35 = arith.subf %34, %24 : vector<2x8x128xf32>
      %36 = math.exp %34 : vector<2x8x128xf32>
      %37 = arith.subf %26, %36 : vector<2x8x128xf32>
      %38 = arith.mulf %37, %37 : vector<2x8x128xf32>
      %cst_14 = arith.constant -2.500000e-01 : f32
      %39 = vector.broadcast %cst_14 : f32 to vector<2x8x128xf32>
      %40 = arith.mulf %39, %34 : vector<2x8x128xf32>
      %cst_15 = arith.constant -7.500000e-01 : f32
      %41 = vector.broadcast %cst_15 : f32 to vector<2x8x128xf32>
      %42 = arith.mulf %41, %35 : vector<2x8x128xf32>
      %43 = arith.subf %40, %42 : vector<2x8x128xf32>
      %44 = arith.mulf %26, %43 : vector<2x8x128xf32>
      %45 = arith.addf %42, %44 : vector<2x8x128xf32>
      %46 = arith.mulf %38, %45 : vector<2x8x128xf32>
      %c0_16 = arith.constant 0 : index
      %c0_17 = arith.constant 0 : index
      %c0_18 = arith.constant 0 : index
      %c0_19 = arith.constant 0 : index
      %47 = vector.load %arg4[%c0_16, %c0_17, %c0_18, %c0_19] : memref<1x6x8x128xf32, #tpu.memory_space<vmem>>, vector<1x2x8x128xf32>
      %48 = vector.shape_cast %47 : vector<1x2x8x128xf32> to vector<2x8x128xf32>
      %49 = vector.shape_cast %46 : vector<2x8x128xf32> to vector<2x1x8x128xf32>
      %cst_20 = arith.constant dense<0.000000e+00> : vector<2x8x128xf32>
      %50 = vector.multi_reduction <add>, %49, %cst_20 [1] : vector<2x1x8x128xf32> to vector<2x8x128xf32>
      %51 = arith.addf %48, %50 : vector<2x8x128xf32>
      %c0_21 = arith.constant 0 : index
      %c0_22 = arith.constant 0 : index
      %c0_23 = arith.constant 0 : index
      %c0_24 = arith.constant 0 : index
      %52 = vector.load %arg4[%c0_21, %c0_22, %c0_23, %c0_24] : memref<1x6x8x128xf32, #tpu.memory_space<vmem>>, vector<1x2x8x128xf32>
      %53 = vector.shape_cast %52 : vector<1x2x8x128xf32> to vector<2x8x128xf32>
      %54 = vector.shape_cast %51 : vector<2x8x128xf32> to vector<1x2x8x128xf32>
      tpu.vector_store %arg4[%c0_21, %c0_22, %c0_23, %c0_24], %54 {strides = array<i32>} : memref<1x6x8x128xf32, #tpu.memory_space<vmem>>, vector<1x2x8x128xf32>,
      %c0_25 = arith.constant 0 : index
      %c2 = arith.constant 2 : index
      %c0_26 = arith.constant 0 : index
      %c0_27 = arith.constant 0 : index
      %55 = vector.load %arg4[%c0_25, %c2, %c0_26, %c0_27] : memref<1x6x8x128xf32, #tpu.memory_space<vmem>>, vector<1x2x8x128xf32>
      %56 = vector.shape_cast %55 : vector<1x2x8x128xf32> to vector<2x8x128xf32>
      %57 = arith.mulf %36, %26 : vector<2x8x128xf32>
      %58 = vector.shape_cast %57 : vector<2x8x128xf32> to vector<2x1x8x128xf32>
      %cst_28 = arith.constant dense<0.000000e+00> : vector<2x8x128xf32>
      %59 = vector.multi_reduction <add>, %58, %cst_28 [1] : vector<2x1x8x128xf32> to vector<2x8x128xf32>
      %60 = arith.addf %56, %59 : vector<2x8x128xf32>
      %c0_29 = arith.constant 0 : index
      %c2_30 = arith.constant 2 : index
      %c0_31 = arith.constant 0 : index
      %c0_32 = arith.constant 0 : index
      %61 = vector.load %arg4[%c0_29, %c2_30, %c0_31, %c0_32] : memref<1x6x8x128xf32, #tpu.memory_space<vmem>>, vector<1x2x8x128xf32>
      %62 = vector.shape_cast %61 : vector<1x2x8x128xf32> to vector<2x8x128xf32>
      %63 = vector.shape_cast %60 : vector<2x8x128xf32> to vector<1x2x8x128xf32>
      tpu.vector_store %arg4[%c0_29, %c2_30, %c0_31, %c0_32], %63 {strides = array<i32>} : memref<1x6x8x128xf32, #tpu.memory_space<vmem>>, vector<1x2x8x128xf32>,
      %c0_33 = arith.constant 0 : index
      %c4 = arith.constant 4 : index
      %c0_34 = arith.constant 0 : index
      %c0_35 = arith.constant 0 : index
      %64 = vector.load %arg4[%c0_33, %c4, %c0_34, %c0_35] : memref<1x6x8x128xf32, #tpu.memory_space<vmem>>, vector<1x2x8x128xf32>
      %65 = vector.shape_cast %64 : vector<1x2x8x128xf32> to vector<2x8x128xf32>
      %66 = arith.addf %36, %26 : vector<2x8x128xf32>
      %67 = vector.shape_cast %66 : vector<2x8x128xf32> to vector<2x1x8x128xf32>
      %cst_36 = arith.constant dense<0.000000e+00> : vector<2x8x128xf32>
      %68 = vector.multi_reduction <add>, %67, %cst_36 [1] : vector<2x1x8x128xf32> to vector<2x8x128xf32>
      %69 = arith.addf %65, %68 : vector<2x8x128xf32>
      %c0_37 = arith.constant 0 : index
      %c4_38 = arith.constant 4 : index
      %c0_39 = arith.constant 0 : index
      %c0_40 = arith.constant 0 : index
      %70 = vector.load %arg4[%c0_37, %c4_38, %c0_39, %c0_40] : memref<1x6x8x128xf32, #tpu.memory_space<vmem>>, vector<1x2x8x128xf32>
      %71 = vector.shape_cast %70 : vector<1x2x8x128xf32> to vector<2x8x128xf32>
      %72 = vector.shape_cast %69 : vector<2x8x128xf32> to vector<1x2x8x128xf32>
      tpu.vector_store %arg4[%c0_37, %c4_38, %c0_39, %c0_40], %72 {strides = array<i32>} : memref<1x6x8x128xf32, #tpu.memory_space<vmem>>, vector<1x2x8x128xf32>,
    } else {
    }
    return
  }
  func.func @transform_0(%arg0: i32, %arg1: i32) -> (i32, i32, i32) {
    %c1_i32 = arith.constant 1 : i32
    %0 = arith.muli %arg0, %c1_i32 : i32
    %1 = arith.addi %0, %arg1 : i32
    %c0_i32 = arith.constant 0 : i32
    %c0_i32_0 = arith.constant 0 : i32
    %c0_i32_1 = arith.constant 0 : i32
    return %c0_i32, %1, %c0_i32_0 : i32, i32, i32
  }
  func.func @transform_1(%arg0: i32, %arg1: i32) -> (i32, i32, i32) {
    %c1_i32 = arith.constant 1 : i32
    %0 = arith.muli %arg0, %c1_i32 : i32
    %1 = arith.addi %0, %arg1 : i32
    %c0_i32 = arith.constant 0 : i32
    %c0_i32_0 = arith.constant 0 : i32
    %c0_i32_1 = arith.constant 0 : i32
    return %c0_i32, %1, %c0_i32_0 : i32, i32, i32
  }
  func.func @transform_2(%arg0: i32, %arg1: i32) -> (i32, i32, i32, i32) {
    %c0_i32 = arith.constant 0 : i32
    %c0_i32_0 = arith.constant 0 : i32
    %c0_i32_1 = arith.constant 0 : i32
    %c0_i32_2 = arith.constant 0 : i32
    return %arg0, %c0_i32, %c0_i32_0, %c0_i32_1 : i32, i32, i32, i32
  }
}

</mosaic_0001>

<llo_original>
// kernel: tpu_custom_call.1
$region0: #{tpu_custom_call.1}
  #allocation0 [shape = 'u32[]', space=smem, size = 0x4, offset = 0x4, fixed_abs, tag = 'smem constant byte address 0x4 - core index']
  #allocation1 [shape = 'u32[72,128]{1,0:T(1,128)}', space=vmem, size = 0x9000, scoped, tag = 'internal scratch']
  %s0 = inlined_call_operand.hbm [shape: f32[2,8,128], index: 0, kind: input, shape index: {}]
  %s1 = inlined_call_operand.hbm [shape: f32[2,8,128], index: 1, kind: input, shape index: {}]
  %s2 = inlined_call_operand.hbm [shape: f32[1,6,8,128], index: 2, kind: output, shape index: {}]
  %s3 = sld [smem:[#allocation0]]
  $region38: #{tpu_custom_call.1} parent=0
    _
  %s5 = ssub.s32 1, %s3
  %s6 = scalar_select 0, %s5, %s3
  $region1: #{tpu_custom_call.1} parent=0
    #allocation2 [shape = 'u8[8192]{0}', space=vmem, size = 0x2000, scoped, tag = 'input window, operand 0, single buffered']
    #allocation3 [shape = 's32[1]{0}', space=sflag, size = 0x4, scoped, tag = 'scoped memory for tpu_custom_call.1']
    #allocation4 [shape = 's32[1]{0}', space=sflag, size = 0x4, scoped, tag = 'scoped memory for tpu_custom_call.1']
    #allocation5 [shape = 'u8[8192]{0}', space=vmem, size = 0x2000, scoped, tag = 'input window, operand 1, single buffered']
    #allocation6 [shape = 's32[1]{0}', space=sflag, size = 0x4, scoped, tag = 'scoped memory for tpu_custom_call.1']
    #allocation7 [shape = 'u8[24576]{0}', space=vmem, size = 0x6000, scoped, tag = 'output window, operand 0, single buffered']
    %7 = vsyncpa [#allocation3], 0
    %8 = vsyncpa [#allocation6], 0
    %9 = vsyncpa [#allocation4], 0
    // Predicated region
    $region2: #{tpu_custom_call.1} parent=1 // pred_check
      _
    $region3: #{tpu_custom_call.1} parent=1 // pred_check_branch
      %11 = sbr.rel (0) target = $region5
    $region4: #{tpu_custom_call.1} parent=1 // pred_region
      %s12 = sadd.s32 0, 0
      %14 = vsyncadd [#allocation3], 0
      %s15 = smul.addr %s12, 8
      %s16 = scalar_lea.hbm %s0, %s15
      %s17 = sshll.u32 %s16, 4
      %s18 = int_to_ptr.hbm [resolvable:$true] %s17
      %s19 = sshll.u32 [#allocation2], 4
      %s20 = int_to_ptr.vmem [resolvable:$true] %s19
      %25 = dma.hbm_to_vmem [thread:$0]  %s18, 256, %s20, [#allocation3], 128, 128, 8
    $region5: #{tpu_custom_call.1} parent=1 // pred_fallthru
      _
    // Predicated region
    $region6: #{tpu_custom_call.1} parent=1 // pred_check
      _
    $region7: #{tpu_custom_call.1} parent=1 // pred_check_branch
      %27 = sbr.rel (0) target = $region9
    $region8: #{tpu_custom_call.1} parent=1 // pred_region
      %s28 = sadd.s32 0, 0
      %30 = vsyncadd [#allocation6], 0
      %s31 = smul.addr %s28, 8
      %s32 = scalar_lea.hbm %s1, %s31
      %s33 = sshll.u32 %s32, 4
      %s34 = int_to_ptr.hbm [resolvable:$true] %s33
      %s35 = sshll.u32 [#allocation5], 4
      %s36 = int_to_ptr.vmem [resolvable:$true] %s35
      %41 = dma.hbm_to_vmem [thread:$0]  %s34, 256, %s36, [#allocation6], 128, 128, 8
    $region9: #{tpu_custom_call.1} parent=1 // pred_fallthru
      _
    // Predicated region
    $region10: #{tpu_custom_call.1} parent=1 // pred_check
      _
    $region11: #{tpu_custom_call.1} parent=1 // pred_check_branch
      %43 = sbr.rel (0) target = $region13
    $region12: #{tpu_custom_call.1} parent=1 // pred_region
      %45 = dma.done [#allocation3], 256
    $region13: #{tpu_custom_call.1} parent=1 // pred_fallthru
      _
    // Predicated region
    $region14: #{tpu_custom_call.1} parent=1 // pred_check
      _
    $region15: #{tpu_custom_call.1} parent=1 // pred_check_branch
      %47 = sbr.rel (0) target = $region17
    $region16: #{tpu_custom_call.1} parent=1 // pred_region
      %49 = dma.done [#allocation6], 256
    $region17: #{tpu_custom_call.1} parent=1 // pred_fallthru
      _
    %s50 = sadd.s32 0, 0
    %s51 = sadd.s32 0, 0
    %p52 = scmp.eq.s32.totalorder 0, 0
    // Predicated region
    $region18: #{tpu_custom_call.1} parent=1 // pred_check
      %p53 = pneg %p52
    $region19: #{tpu_custom_call.1} parent=1 // pred_check_branch
      %55 = sbr.rel (%p53) target = $region21
    $region20: #{tpu_custom_call.1} parent=1 // pred_region
      %56 = vst [vmem:[#allocation7] sm:$0xff] 0.0
      %57 = vst [vmem:[#allocation7 + $0x8] sm:$0xff] 0.0
      %58 = vst [vmem:[#allocation7 + $0x10] sm:$0xff] 0.0
      %59 = vst [vmem:[#allocation7 + $0x18] sm:$0xff] 0.0
      %60 = vst [vmem:[#allocation7 + $0x20] sm:$0xff] 0.0
      %61 = vst [vmem:[#allocation7 + $0x28] sm:$0xff] 0.0
    $region21: #{tpu_custom_call.1} parent=1 // pred_fallthru
      _
    %s62 = sadd.s32 0, 0
    %s63 = smul.u32 %s62, 1024
    %v64 = vld [vmem:[#allocation2] sm:$0xff]
    %v65 = vld [vmem:[#allocation2 + $0x8] sm:$0xff]
    %v66 = vld [vmem:[#allocation5] sm:$0xff]
    %v67 = vld [vmem:[#allocation5 + $0x8] sm:$0xff]
    %s68 = sadd.s32 %s63, 1024
    %p69 = scmp.le.s32.totalorder %s68, 1024
    // Predicated region
    $region22: #{tpu_custom_call.1} parent=1 // pred_check
      %p70 = pneg %p69
    $region23: #{tpu_custom_call.1} parent=1 // pred_check_branch
      %72 = sbr.rel (%p70) target = $region25
    $region24: #{tpu_custom_call.1} parent=1 // pred_region
      %v73 = vand.u32 2147483647, %v64
      %v74 = vand.u32 2147483647, %v65
      %v75 = vsub.f32 0.0, %v73
      %v76 = vsub.f32 0.0, %v74
      %v77 = vmul.f32 %v75, 1.442695
      %v78 = vpow.pop %v77
      %v79 = vmul.f32 %v76, 1.442695
      %v80 = vpow.pop %v79
      %v81 = vadd.f32 %v78, 1.0
      %v82 = vlog2.pop %v81
      %v83 = vmul.f32 %v82, 0.6931472
      %v84 = vmul.f32 -0.5, %v78
      %v85 = vadd.f32 %v84, 1.0
      %v86 = vmul.f32 %v85, %v78
      %v87 = vand.u32 2147483647, %v78
      %vm88 = vcmp.lt.f32.partialorder %v87, 0.0004427343
      %v89 = vsel %vm88, %v86, %v83
      %v90 = vadd.f32 %v80, 1.0
      %v91 = vlog2.pop %v90
      %v92 = vmul.f32 %v91, 0.6931472
      %v93 = vmul.f32 -0.5, %v80
      %v94 = vadd.f32 %v93, 1.0
      %v95 = vmul.f32 %v94, %v80
      %v96 = vand.u32 2147483647, %v80
      %vm97 = vcmp.lt.f32.partialorder %v96, 0.0004427343
      %v98 = vsel %vm97, %v95, %v92
      %v99 = vmin.f32 %v64, 0.0
      %v100 = vmin.f32 %v65, 0.0
      %v101 = vsub.f32 %v99, %v89
      %v102 = vsub.f32 %v100, %v98
      %v103 = vsub.f32 %v101, %v64
      %v104 = vsub.f32 %v102, %v65
      %v105 = vmul.f32 %v101, 1.442695
      %v106 = vpow.pop %v105
      %v107 = vmul.f32 %v102, 1.442695
      %v108 = vpow.pop %v107
      %v109 = vsub.f32 %v66, %v106
      %v110 = vsub.f32 %v67, %v108
      %v111 = vmul.f32 %v109, %v109
      %v112 = vmul.f32 %v110, %v110
      %v113 = vmul.f32 %v101, -0.25
      %v114 = vmul.f32 %v102, -0.25
      %v115 = vmul.f32 %v103, -0.75
      %v116 = vmul.f32 %v104, -0.75
      %v117 = vsub.f32 %v113, %v115
      %v118 = vsub.f32 %v114, %v116
      %v119 = vmul.f32 %v66, %v117
      %v120 = vmul.f32 %v67, %v118
      %v121 = vadd.f32 %v115, %v119
      %v122 = vadd.f32 %v116, %v120
      %v123 = vmul.f32 %v111, %v121
      %v124 = vmul.f32 %v112, %v122
      %v125 = vld [vmem:[#allocation7] sm:$0xff]
      %v126 = vld [vmem:[#allocation7 + $0x8] sm:$0xff]
      %v127 = vadd.f32 %v123, 0.0
      %v128 = vadd.f32 %v124, 0.0
      %v129 = vadd.f32 %v125, %v127
      %v130 = vadd.f32 %v126, %v128
      %131 = vst [vmem:[#allocation7] sm:$0xff] %v129
      %132 = vst [vmem:[#allocation7 + $0x8] sm:$0xff] %v130
      %s133 = scalar_lea.vmem [#allocation7], 16
      %v134 = vld [vmem:[%s133] sm:$0xff]
      %v135 = vld [vmem:[%s133 + $0x8] sm:$0xff]
      %v136 = vmul.f32 %v106, %v66
      %v137 = vmul.f32 %v108, %v67
      %v138 = vadd.f32 %v136, 0.0
      %v139 = vadd.f32 %v137, 0.0
      %v140 = vadd.f32 %v134, %v138
      %v141 = vadd.f32 %v135, %v139
      %142 = vst [vmem:[%s133] sm:$0xff] %v140
      %143 = vst [vmem:[%s133 + $0x8] sm:$0xff] %v141
      %s144 = scalar_lea.vmem [#allocation7], 32
      %v145 = vld [vmem:[%s144] sm:$0xff]
      %v146 = vld [vmem:[%s144 + $0x8] sm:$0xff]
      %v147 = vadd.f32 %v106, %v66
      %v148 = vadd.f32 %v108, %v67
      %v149 = vadd.f32 %v147, 0.0
      %v150 = vadd.f32 %v148, 0.0
      %v151 = vadd.f32 %v145, %v149
      %v152 = vadd.f32 %v146, %v150
      %153 = vst [vmem:[%s144] sm:$0xff] %v151
      %154 = vst [vmem:[%s144 + $0x8] sm:$0xff] %v152
    $region25: #{tpu_custom_call.1} parent=1 // pred_fallthru
      _
    %p155 = scmp.gt.s32.totalorder %s68, 1024
    // Predicated region
    $region26: #{tpu_custom_call.1} parent=1 // pred_check
      %p156 = pneg %p155
    $region27: #{tpu_custom_call.1} parent=1 // pred_check_branch
      %158 = sbr.rel (%p156) target = $region29
    $region28: #{tpu_custom_call.1} parent=1 // pred_region
      %s159 = ssub.s32 1024, %s63
      %v160 = vlaneseq
      %v161 = vshrl.u32 %v160, 7
      %v162 = vlaneseq
      %v163 = vand.u32 %v162, 127
      %v164 = vmul.u32 %v161, 128
      %v165 = vadd.s32 %v164, %v163
      %v166 = vstv %s159
      %vm167 = vcmp.lt.s32.totalorder %v165, %v166
      %v168 = vsel %vm167, %v64, -100.0
      %v169 = vsel %vm167, %v65, -100.0
      %v170 = vsel %vm167, %v66, 0.0
      %v171 = vsel %vm167, %v67, 0.0
      %v172 = vand.u32 2147483647, %v168
      %v173 = vand.u32 2147483647, %v169
      %v174 = vsub.f32 0.0, %v172
      %v175 = vsub.f32 0.0, %v173
      %v176 = vmul.f32 %v174, 1.442695
      %v177 = vpow.pop %v176
      %v178 = vmul.f32 %v175, 1.442695
      %v179 = vpow.pop %v178
      %v180 = vadd.f32 %v177, 1.0
      %v181 = vlog2.pop %v180
      %v182 = vmul.f32 %v181, 0.6931472
      %v183 = vmul.f32 -0.5, %v177
      %v184 = vadd.f32 %v183, 1.0
      %v185 = vmul.f32 %v184, %v177
      %v186 = vand.u32 2147483647, %v177
      %vm187 = vcmp.lt.f32.partialorder %v186, 0.0004427343
      %v188 = vsel %vm187, %v185, %v182
      %v189 = vadd.f32 %v179, 1.0
      %v190 = vlog2.pop %v189
      %v191 = vmul.f32 %v190, 0.6931472
      %v192 = vmul.f32 -0.5, %v179
      %v193 = vadd.f32 %v192, 1.0
      %v194 = vmul.f32 %v193, %v179
      %v195 = vand.u32 2147483647, %v179
      %vm196 = vcmp.lt.f32.partialorder %v195, 0.0004427343
      %v197 = vsel %vm196, %v194, %v191
      %v198 = vmin.f32 %v168, 0.0
      %v199 = vmin.f32 %v169, 0.0
      %v200 = vsub.f32 %v198, %v188
      %v201 = vsub.f32 %v199, %v197
      %v202 = vsub.f32 %v200, %v168
      %v203 = vsub.f32 %v201, %v169
      %v204 = vmul.f32 %v200, 1.442695
      %v205 = vpow.pop %v204
      %v206 = vmul.f32 %v201, 1.442695
      %v207 = vpow.pop %v206
      %v208 = vsub.f32 %v170, %v205
      %v209 = vsub.f32 %v171, %v207
      %v210 = vmul.f32 %v208, %v208
      %v211 = vmul.f32 %v209, %v209
      %v212 = vmul.f32 %v200, -0.25
      %v213 = vmul.f32 %v201, -0.25
      %v214 = vmul.f32 %v202, -0.75
      %v215 = vmul.f32 %v203, -0.75
      %v216 = vsub.f32 %v212, %v214
      %v217 = vsub.f32 %v213, %v215
      %v218 = vmul.f32 %v170, %v216
      %v219 = vmul.f32 %v171, %v217
      %v220 = vadd.f32 %v214, %v218
      %v221 = vadd.f32 %v215, %v219
      %v222 = vmul.f32 %v210, %v220
      %v223 = vmul.f32 %v211, %v221
      %v224 = vld [vmem:[#allocation7] sm:$0xff]
      %v225 = vld [vmem:[#allocation7 + $0x8] sm:$0xff]
      %v226 = vadd.f32 %v222, 0.0
      %v227 = vadd.f32 %v223, 0.0
      %v228 = vadd.f32 %v224, %v226
      %v229 = vadd.f32 %v225, %v227
      %230 = vst [vmem:[#allocation7] sm:$0xff] %v228
      %231 = vst [vmem:[#allocation7 + $0x8] sm:$0xff] %v229
      %s232 = scalar_lea.vmem [#allocation7], 16
      %v233 = vld [vmem:[%s232] sm:$0xff]
      %v234 = vld [vmem:[%s232 + $0x8] sm:$0xff]
      %v235 = vmul.f32 %v205, %v170
      %v236 = vmul.f32 %v207, %v171
      %v237 = vadd.f32 %v235, 0.0
      %v238 = vadd.f32 %v236, 0.0
      %v239 = vadd.f32 %v233, %v237
      %v240 = vadd.f32 %v234, %v238
      %241 = vst [vmem:[%s232] sm:$0xff] %v239
      %242 = vst [vmem:[%s232 + $0x8] sm:$0xff] %v240
      %s243 = scalar_lea.vmem [#allocation7], 32
      %v244 = vld [vmem:[%s243] sm:$0xff]
      %v245 = vld [vmem:[%s243 + $0x8] sm:$0xff]
      %v246 = vadd.f32 %v205, %v170
      %v247 = vadd.f32 %v207, %v171
      %v248 = vadd.f32 %v246, 0.0
      %v249 = vadd.f32 %v247, 0.0
      %v250 = vadd.f32 %v244, %v248
      %v251 = vadd.f32 %v245, %v249
      %252 = vst [vmem:[%s243] sm:$0xff] %v250
      %253 = vst [vmem:[%s243 + $0x8] sm:$0xff] %v251
    $region29: #{tpu_custom_call.1} parent=1 // pred_fallthru
      _
    // Predicated region
    $region30: #{tpu_custom_call.1} parent=1 // pred_check
      _
    $region31: #{tpu_custom_call.1} parent=1 // pred_check_branch
      %255 = sbr.rel (0) target = $region33
    $region32: #{tpu_custom_call.1} parent=1 // pred_region
      %257 = vsyncadd [#allocation4], 0
      %s258 = sshll.u32 [#allocation7], 4
      %s259 = int_to_ptr.vmem [resolvable:$true] %s258
      %s260 = sshll.u32 %s2, 4
      %s261 = int_to_ptr.hbm [resolvable:$true] %s260
      %266 = dma.vmem_to_hbm [thread:$0]  %s259, 768, %s261, [#allocation4], 128, 128, 8
    $region33: #{tpu_custom_call.1} parent=1 // pred_fallthru
      _
    // Predicated region
    $region34: #{tpu_custom_call.1} parent=1 // pred_check
      _
    $region35: #{tpu_custom_call.1} parent=1 // pred_check_branch
      %268 = sbr.rel (0) target = $region37
    $region36: #{tpu_custom_call.1} parent=1 // pred_region
      %270 = dma.done [#allocation4], 768
    $region37: #{tpu_custom_call.1} parent=1 // pred_fallthru
      _
    %271 = vsyncpa [#allocation3], 1
    %272 = vsyncpa [#allocation6], 1
    %273 = vsyncpa [#allocation4], 1

</llo_original>
